<compile_context>
chip_gen: v7x
topology: tpu7x:2x2x1
jax: 0.10.0
libtpu: 0.0.40
codegen_flags: <defaults>
</compile_context>

<pallas_src>
import math

import jax
import jax.numpy as jnp
from jax.experimental import pallas as pl
from jax.experimental.pallas import tpu as pltpu


def _copy_kernel(x_ref, o_ref):
    # Flatten has no arithmetic: the hot path is the HBM->VMEM->HBM tile copy.
    o_ref[...] = x_ref[...]


def _choose_slab(total: int, itemsize: int):
    """Pick a lane/sublane-dense (rows, lane) view and a block row count."""
    if total % 128 != 0:
        return None
    # Largest lane width (multiple of 128) dividing `total` while keeping the
    # sublane (rows) axis a multiple of 8; fall back to any 128-multiple divisor.
    lane = None
    for cand in (2048, 1024, 512, 256, 128):
        if total % cand == 0 and (total // cand) % 8 == 0:
            lane = cand
            break
    if lane is None:
        for cand in (2048, 1024, 512, 256, 128):
            if total % cand == 0:
                lane = cand
                break
    rows = total // lane
    # Target ~2 MiB per block: 2 arrays x 2 pipeline buffers x 2 MiB = 8 MiB,
    # comfortably under the default scoped VMEM on v5e (16 MiB) / v6e / v7x.
    target_rows = max(8, (2 * 1024 * 1024) // (lane * itemsize))
    target_rows -= target_rows % 8
    if rows <= target_rows:
        block_rows = rows          # full extent: always a legal block dim
    else:
        block_rows = target_rows   # multiple of 8; last block may be partial
    return rows, lane, block_rows


@jax.jit
def flatten(x: jax.Array) -> jax.Array:
    """Pallas equivalent of torch Flatten: (B, ...) -> (B, prod(...))."""
    b = x.shape[0]
    n = math.prod(x.shape[1:]) if x.ndim > 1 else 1
    total = b * n
    itemsize = jnp.dtype(x.dtype).itemsize

    slab = _choose_slab(total, itemsize)
    if slab is None:
        # Fallback for totals not divisible by 128: single full-array block
        # (block shape == array shape is always legal).
        # TODO(synk): pad-to-128 path for very large non-128-aligned shapes.
        x2d = jnp.reshape(x, (b, n))
        return pl.pallas_call(
            _copy_kernel,
            out_shape=jax.ShapeDtypeStruct((b, n), x.dtype),
            input_output_aliases={0: 0},
        )(x2d)

    rows, lane, block_rows = slab
    # Glue: metadata-only reshape to a lane-dense slab.
    x_slab = jnp.reshape(x, (rows, lane))

    out_slab = pl.pallas_call(
        _copy_kernel,
        out_shape=jax.ShapeDtypeStruct((rows, lane), x.dtype),
        grid=(pl.cdiv(rows, block_rows),),
        in_specs=[pl.BlockSpec((block_rows, lane), lambda i: (i, 0))],
        out_specs=pl.BlockSpec((block_rows, lane), lambda i: (i, 0)),
        input_output_aliases={0: 0},
        compiler_params=pltpu.CompilerParams(
            dimension_semantics=("parallel",),
        ),
    )(x_slab)

    # Metadata-only collapse back to (B, N).
    return jnp.reshape(out_slab, (b, n))


if __name__ == "__main__":
    key = jax.random.PRNGKey(0)
    # Small NCHW input: batch=2, channels=4, spatial=16x16 -> flattened N=1024.
    x = jax.random.normal(key, (2, 4, 16, 16), dtype=jnp.float32)

    y = flatten(x)
    y = jax.block_until_ready(y)

    # Correctness check against the reference semantics (x.view(B, -1)).
    ref = jnp.reshape(x, (x.shape[0], -1))
    assert y.shape == (2, 4 * 16 * 16), y.shape
    assert y.dtype == x.dtype
    assert bool(jnp.array_equal(y, ref))

    print("KERNEL_OK")
</pallas_src>

<mosaic_0001>
module attributes {stable_mosaic.version = 11 : i64} {
  func.func @_copy_kernel(%arg0: i32, %arg1: memref<8x256xf32, #tpu.memory_space<vmem>>, %arg2: memref<8x256xf32, #tpu.memory_space<vmem>>) attributes {dimension_semantics = [#tpu.dimension_semantics<parallel>], iteration_bounds = array<i64: 1>, scalar_prefetch = 0 : i64, scratch_operands = 0 : i64, tpu.core_type = #tpu.core_type<tc>, window_params = [{transform_indices = @transform_0, window_bounds = array<i64: 8, 256>}, {transform_indices = @transform_1, window_bounds = array<i64: 8, 256>}]} {
    %c0 = arith.constant 0 : index
    %c0_0 = arith.constant 0 : index
    %0 = vector.load %arg1[%c0, %c0_0] : memref<8x256xf32, #tpu.memory_space<vmem>>, vector<8x256xf32>
    %c0_1 = arith.constant 0 : index
    %c0_2 = arith.constant 0 : index
    %1 = vector.load %arg2[%c0_1, %c0_2] : memref<8x256xf32, #tpu.memory_space<vmem>>, vector<8x256xf32>
    tpu.vector_store %arg2[%c0_1, %c0_2], %0 {strides = array<i32>} : memref<8x256xf32, #tpu.memory_space<vmem>>, vector<8x256xf32>,
    return
  }
  func.func @transform_0(%arg0: i32) -> (i32, i32) {
    %c0_i32 = arith.constant 0 : i32
    %c0_i32_0 = arith.constant 0 : i32
    return %arg0, %c0_i32 : i32, i32
  }
  func.func @transform_1(%arg0: i32) -> (i32, i32) {
    %c0_i32 = arith.constant 0 : i32
    %c0_i32_0 = arith.constant 0 : i32
    return %arg0, %c0_i32 : i32, i32
  }
}

</mosaic_0001>

<llo_original>
// kernel: flatten.1
$region0: #{flatten.1}
  #allocation0 [shape = 'u32[]', space=smem, size = 0x4, offset = 0x4, fixed_abs, tag = 'smem constant byte address 0x4 - core index']
  #allocation1 [shape = 'u32[144,128]{1,0:T(1,128)}', space=vmem, size = 0x12000, scoped, tag = 'internal scratch']
  %s0 = inlined_call_operand.vmem [shape: f32[8,256], index: 0, kind: input, shape index: {}, may-alias: {0,1}]
  %s1 = inlined_call_operand.vmem [shape: f32[8,256], index: 1, kind: output, shape index: {}, may-alias: {0,1}]
  %s2 = sld [smem:[#allocation0]]
  $region14: #{flatten.1} parent=0
    _
  %s4 = ssub.s32 1, %s2
  %s5 = scalar_select 0, %s4, %s2
  // Predicated region
  $region2: #{flatten.1} parent=0 // pred_check
    _
  $region3: #{flatten.1} parent=0 // pred_check_branch
    %7 = sbr.rel (0) target = $region5
  $region4: #{flatten.1} parent=0 // pred_region
    _
  $region5: #{flatten.1} parent=0 // pred_fallthru
    _
  %v8 = vld [vmem:[%s0] sm:$0xff]
  %v9 = vld [vmem:[%s0 + $0x8] sm:$0xff]
  %10 = vst [vmem:[%s1] sm:$0xff] %v8
  %11 = vst [vmem:[%s1 + $0x8] sm:$0xff] %v9
  // Predicated region
  $region6: #{flatten.1} parent=0 // pred_check
    _
  $region7: #{flatten.1} parent=0 // pred_check_branch
    %13 = sbr.rel (0) target = $region9
  $region8: #{flatten.1} parent=0 // pred_region
    _
  $region9: #{flatten.1} parent=0 // pred_fallthru
    _
  // Predicated region
  $region10: #{flatten.1} parent=0 // pred_check
    _
  $region11: #{flatten.1} parent=0 // pred_check_branch
    %15 = sbr.rel (0) target = $region13
  $region12: #{flatten.1} parent=0 // pred_region
    _
  $region13: #{flatten.1} parent=0 // pred_fallthru
    _

</llo_original>
